<compile_context>
chip_gen: v6e
topology: v6e:2x2x1
jax: 0.10.0
libtpu: 0.0.40
codegen_flags: <defaults>
</compile_context>

<pallas_src>
import jax
import jax.numpy as jnp
from jax.experimental import pallas as pl
from jax.experimental.pallas import tpu as pltpu


def _dynamics_kernel(x_ref, w1t_ref, b1_ref, w2t_ref, b2_ref, w3t_ref, b3_ref,
                     o_ref):
    """One batch tile (batch on the lane axis) of DynamicsNN.forward.

    x_ref   : (d_in, tile_b)  cat(state, action) transposed
    w*t_ref : weights pre-transposed to (out_features, in_features)
    b*_ref  : biases as (out_features, 1) f32 columns
    o_ref   : (S, tile_b) output (transposed)
    Dots accumulate in f32 on the MXU; bias add / ReLU stay in f32.
    """
    cdt = w2t_ref.dtype  # operand (compute) dtype: bf16 or f32

    h1 = (jnp.dot(w1t_ref[...], x_ref[...],
                  preferred_element_type=jnp.float32) + b1_ref[...])
    h1 = jnp.maximum(h1, 0.0).astype(cdt)

    h2 = (jnp.dot(w2t_ref[...], h1,
                  preferred_element_type=jnp.float32) + b2_ref[...])
    h2 = jnp.maximum(h2, 0.0).astype(cdt)

    o_ref[...] = (jnp.dot(w3t_ref[...], h2,
                          preferred_element_type=jnp.float32)
                  + b3_ref[...]).astype(o_ref.dtype)


_LANE = 128            # lane width: output/batch tiles are multiples of this
_TILE_CAP = 16 * 1024  # max columns per grid step (~10 MB VMEM in this layout)


def _choose_tiling(batch, cap=_TILE_CAP, lane=_LANE):
    """Pick (tile_b, padded_batch, grid_steps).

    * tile_b is a multiple of 128 so output stores are lane-dense, except for
      tiny batches (< 256) where a single full-batch block is used (a block dim
      equal to the full array dim is always legal).
    * For batch >= 256 the grid always has >= 2 steps so "parallel" semantics
      can shard the batch across v7x's two TensorCores.
    * Padding waste is < 128 columns per grid step.
    """
    if batch < 2 * lane:
        return batch, batch, 1
    steps = max(2, pl.cdiv(batch, cap))
    tile = pl.cdiv(pl.cdiv(batch, steps), lane) * lane
    return tile, tile * steps, steps


def dynamics_nn_forward(state, action, params, *, tile_b=None,
                        compute_dtype=jnp.bfloat16, out_dtype=jnp.float32):
    """Fused forward pass of DynamicsNN.

    state : (B, state_dim)  float32
    action: (B, action_dim) float32
    params: dict with w1 (sd+ad, H), b1 (1, H), w2 (H, H), b2 (1, H),
            w3 (H, sd), b3 (1, sd)   (weights stored as (in, out)).
    Returns (B, state_dim) in out_dtype (default float32).
    """
    B, state_dim = state.shape
    Ba, action_dim = action.shape
    assert Ba == B, "state and action must share the batch dimension"
    d_in = state_dim + action_dim
    H = params["w1"].shape[1]
    S = params["w3"].shape[1]

    # ---- wrapper-side layout plumbing (batch -> lanes) ----------------------
    # concat + transpose + cast fuse into one cheap XLA op; this replaces the
    # previous row-split of W1 with a single K=d_in dot inside the kernel.
    x_t = jnp.concatenate([state, action], axis=-1).T.astype(compute_dtype)

    if tile_b is None:
        tile_b, b_pad, steps = _choose_tiling(B)
    else:
        assert tile_b == B or tile_b % _LANE == 0, (
            f"tile_b must equal the batch or be a multiple of {_LANE}")
        steps = pl.cdiv(B, tile_b)
        b_pad = steps * tile_b
    if b_pad != B:
        x_t = jnp.pad(x_t, ((0, 0), (0, b_pad - B)))   # zero-pad extra columns

    # Weights pre-transposed to (out, in); biases as f32 columns (added to the
    # f32 accumulators, so bf16 only quantizes weights/activations).
    w1t = params["w1"].T.astype(compute_dtype)               # (H, d_in)
    w2t = params["w2"].T.astype(compute_dtype)               # (H, H)
    w3t = params["w3"].T.astype(compute_dtype)               # (S, H)
    b1c = params["b1"].reshape(-1, 1).astype(jnp.float32)    # (H, 1)
    b2c = params["b2"].reshape(-1, 1).astype(jnp.float32)    # (H, 1)
    b3c = params["b3"].reshape(-1, 1).astype(jnp.float32)    # (S, 1)

    # Constant (grid-invariant) operands: same (0, 0) block every step, DMA'd
    # once and kept resident in VMEM.
    const = lambda shape: pl.BlockSpec(shape, lambda i: (0, 0))

    flops = 2 * b_pad * (d_in * H + H * H + H * S)
    bytes_accessed = (
        x_t.size * x_t.dtype.itemsize
        + sum(int(a.size) * a.dtype.itemsize
              for a in (w1t, w2t, w3t, b1c, b2c, b3c))
        + b_pad * S * jnp.dtype(out_dtype).itemsize)

    out_t = pl.pallas_call(
        _dynamics_kernel,
        out_shape=jax.ShapeDtypeStruct((S, b_pad), out_dtype),
        grid_spec=pltpu.PrefetchScalarGridSpec(
            num_scalar_prefetch=0,
            grid=(steps,),
            in_specs=[
                pl.BlockSpec((d_in, tile_b), lambda i: (0, i)),   # x.T tile
                const((H, d_in)),   # W1.T
                const((H, 1)),      # b1
                const((H, H)),      # W2.T
                const((H, 1)),      # b2
                const((S, H)),      # W3.T
                const((S, 1)),      # b3
            ],
            out_specs=pl.BlockSpec((S, tile_b), lambda i: (0, i)),
        ),
        compiler_params=pltpu.CompilerParams(
            dimension_semantics=("parallel",),
            vmem_limit_bytes=32 * 1024 * 1024),
        cost_estimate=pl.CostEstimate(flops=flops, transcendentals=0,
                                      bytes_accessed=int(bytes_accessed)),
    )(x_t, w1t, b1c, w2t, b2c, w3t, b3c)

    if b_pad != B:
        out_t = out_t[:, :B]
    return out_t.T    # (B, S); transpose-back is layout plumbing in the wrapper


def init_params(key, state_dim, action_dim, hidden_size):
    """nn.Linear-style init (uniform +/- 1/sqrt(fan_in)); weights stored as
    (in, out), biases as (1, out)."""
    k = jax.random.split(key, 6)
    d_in = state_dim + action_dim

    def lin(kw, kb, fan_in, fan_out):
        bound = 1.0 / jnp.sqrt(fan_in)
        w = jax.random.uniform(kw, (fan_in, fan_out), jnp.float32, -bound, bound)
        b = jax.random.uniform(kb, (1, fan_out), jnp.float32, -bound, bound)
        return w, b

    w1, b1 = lin(k[0], k[1], d_in, hidden_size)
    w2, b2 = lin(k[2], k[3], hidden_size, hidden_size)
    w3, b3 = lin(k[4], k[5], hidden_size, state_dim)
    return {"w1": w1, "b1": b1, "w2": w2, "b2": b2, "w3": w3, "b3": b3}


def _reference(state, action, p):
    x = jnp.concatenate([state, action], axis=-1)
    h1 = jax.nn.relu(x @ p["w1"] + p["b1"])
    h2 = jax.nn.relu(h1 @ p["w2"] + p["b2"])
    return h2 @ p["w3"] + p["b3"]


if __name__ == "__main__":
    # Small shapes consistent with a quadrotor dynamics model.
    batch, state_dim, action_dim, hidden_size = 8, 10, 4, 32

    key = jax.random.PRNGKey(0)
    k_s, k_a, k_p = jax.random.split(key, 3)
    state = jax.random.normal(k_s, (batch, state_dim), jnp.float32)
    action = jax.random.normal(k_a, (batch, action_dim), jnp.float32)
    params = init_params(k_p, state_dim, action_dim, hidden_size)

    ref = _reference(state, action, params)

    # Exact path (f32 operands) -- tight tolerance check.
    out_f32 = jax.block_until_ready(
        dynamics_nn_forward(state, action, params, compute_dtype=jnp.float32))
    assert out_f32.shape == (batch, state_dim)
    assert jnp.allclose(out_f32, ref, atol=1e-5, rtol=1e-5)

    # Default fast path (bf16 operands, f32 accumulation) -- loose tolerance.
    out = jax.block_until_ready(dynamics_nn_forward(state, action, params))
    assert out.shape == (batch, state_dim)
    assert jnp.allclose(out, ref, atol=5e-2, rtol=5e-2)

    # Multi-step / padded path: grid >= 2 lane-aligned tiles, batch padding.
    batch2 = 300
    k_s2, k_a2 = jax.random.split(jax.random.PRNGKey(1), 2)
    state2 = jax.random.normal(k_s2, (batch2, state_dim), jnp.float32)
    action2 = jax.random.normal(k_a2, (batch2, action_dim), jnp.float32)
    ref2 = _reference(state2, action2, params)
    out2 = jax.block_until_ready(
        dynamics_nn_forward(state2, action2, params, compute_dtype=jnp.float32))
    assert out2.shape == (batch2, state_dim)
    assert jnp.allclose(out2, ref2, atol=1e-5, rtol=1e-5)

    print("KERNEL_OK")
</pallas_src>

<mosaic_0001>
module attributes {stable_mosaic.version = 11 : i64} {
  func.func @_dynamics_kernel(%arg0: i32, %arg1: memref<14x8xf32, #tpu.memory_space<vmem>>, %arg2: memref<32x14xf32, #tpu.memory_space<vmem>>, %arg3: memref<32x1xf32, #tpu.memory_space<vmem>>, %arg4: memref<32x32xf32, #tpu.memory_space<vmem>>, %arg5: memref<32x1xf32, #tpu.memory_space<vmem>>, %arg6: memref<10x32xf32, #tpu.memory_space<vmem>>, %arg7: memref<10x1xf32, #tpu.memory_space<vmem>>, %arg8: memref<10x8xf32, #tpu.memory_space<vmem>>) attributes {dimension_semantics = [#tpu.dimension_semantics<parallel>], iteration_bounds = array<i64: 1>, scalar_prefetch = 0 : i64, scratch_operands = 0 : i64, tpu.core_type = #tpu.core_type<tc>, window_params = [{transform_indices = @transform_0, window_bounds = array<i64: 14, 8>}, {pipeline_mode = #tpu.pipeline_mode<synchronous>, transform_indices = @transform_1, window_bounds = array<i64: 32, 14>}, {pipeline_mode = #tpu.pipeline_mode<synchronous>, transform_indices = @transform_2, window_bounds = array<i64: 32, 1>}, {pipeline_mode = #tpu.pipeline_mode<synchronous>, transform_indices = @transform_3, window_bounds = array<i64: 32, 32>}, {pipeline_mode = #tpu.pipeline_mode<synchronous>, transform_indices = @transform_4, window_bounds = array<i64: 32, 1>}, {pipeline_mode = #tpu.pipeline_mode<synchronous>, transform_indices = @transform_5, window_bounds = array<i64: 10, 32>}, {pipeline_mode = #tpu.pipeline_mode<synchronous>, transform_indices = @transform_6, window_bounds = array<i64: 10, 1>}, {transform_indices = @transform_7, window_bounds = array<i64: 10, 8>}]} {
    %c0 = arith.constant 0 : index
    %c0_0 = arith.constant 0 : index
    %0 = vector.load %arg2[%c0, %c0_0] : memref<32x14xf32, #tpu.memory_space<vmem>>, vector<32x14xf32>
    %c0_1 = arith.constant 0 : index
    %c0_2 = arith.constant 0 : index
    %1 = vector.load %arg1[%c0_1, %c0_2] : memref<14x8xf32, #tpu.memory_space<vmem>>, vector<14x8xf32>
    %cst = arith.constant dense<0.000000e+00> : vector<32x8xf32>
    %2 = tpu.matmul %0, %1, %cst {dimension_numbers = #tpu.dot_dimension_numbers<[1], [0], [0], [1], [0, 0, 1, 1], [], []>} : vector<32x14xf32>, vector<14x8xf32>, vector<32x8xf32> -> vector<32x8xf32>
    %c0_3 = arith.constant 0 : index
    %c0_4 = arith.constant 0 : index
    %3 = vector.load %arg3[%c0_3, %c0_4] : memref<32x1xf32, #tpu.memory_space<vmem>>, vector<32x1xf32>
    %4 = vector.broadcast %3 : vector<32x1xf32> to vector<32x8xf32>
    %5 = arith.addf %2, %4 : vector<32x8xf32>
    %cst_5 = arith.constant 0.000000e+00 : f32
    %6 = vector.broadcast %cst_5 : f32 to vector<32x8xf32>
    %7 = arith.maximumf %5, %6 : vector<32x8xf32>
    %c0_6 = arith.constant 0 : index
    %c0_7 = arith.constant 0 : index
    %8 = vector.load %arg4[%c0_6, %c0_7] : memref<32x32xf32, #tpu.memory_space<vmem>>, vector<32x32xf32>
    %cst_8 = arith.constant dense<0.000000e+00> : vector<32x8xf32>
    %9 = tpu.matmul %8, %7, %cst_8 {dimension_numbers = #tpu.dot_dimension_numbers<[1], [0], [0], [1], [0, 0, 1, 1], [], []>} : vector<32x32xf32>, vector<32x8xf32>, vector<32x8xf32> -> vector<32x8xf32>
    %c0_9 = arith.constant 0 : index
    %c0_10 = arith.constant 0 : index
    %10 = vector.load %arg5[%c0_9, %c0_10] : memref<32x1xf32, #tpu.memory_space<vmem>>, vector<32x1xf32>
    %11 = vector.broadcast %10 : vector<32x1xf32> to vector<32x8xf32>
    %12 = arith.addf %9, %11 : vector<32x8xf32>
    %cst_11 = arith.constant 0.000000e+00 : f32
    %13 = vector.broadcast %cst_11 : f32 to vector<32x8xf32>
    %14 = arith.maximumf %12, %13 : vector<32x8xf32>
    %c0_12 = arith.constant 0 : index
    %c0_13 = arith.constant 0 : index
    %15 = vector.load %arg6[%c0_12, %c0_13] : memref<10x32xf32, #tpu.memory_space<vmem>>, vector<10x32xf32>
    %cst_14 = arith.constant dense<0.000000e+00> : vector<10x8xf32>
    %16 = tpu.matmul %15, %14, %cst_14 {dimension_numbers = #tpu.dot_dimension_numbers<[1], [0], [0], [1], [0, 0, 1, 1], [], []>} : vector<10x32xf32>, vector<32x8xf32>, vector<10x8xf32> -> vector<10x8xf32>
    %c0_15 = arith.constant 0 : index
    %c0_16 = arith.constant 0 : index
    %17 = vector.load %arg7[%c0_15, %c0_16] : memref<10x1xf32, #tpu.memory_space<vmem>>, vector<10x1xf32>
    %18 = vector.broadcast %17 : vector<10x1xf32> to vector<10x8xf32>
    %19 = arith.addf %16, %18 : vector<10x8xf32>
    %c0_17 = arith.constant 0 : index
    %c0_18 = arith.constant 0 : index
    %20 = vector.load %arg8[%c0_17, %c0_18] : memref<10x8xf32, #tpu.memory_space<vmem>>, vector<10x8xf32>
    tpu.vector_store %arg8[%c0_17, %c0_18], %19 {strides = array<i32>} : memref<10x8xf32, #tpu.memory_space<vmem>>, vector<10x8xf32>,
    return
  }
  func.func @transform_0(%arg0: i32) -> (i32, i32) {
    %c0_i32 = arith.constant 0 : i32
    %c0_i32_0 = arith.constant 0 : i32
    return %c0_i32, %arg0 : i32, i32
  }
  func.func @transform_1(%arg0: i32) -> (i32, i32) {
    %c0_i32 = arith.constant 0 : i32
    %c0_i32_0 = arith.constant 0 : i32
    %c0_i32_1 = arith.constant 0 : i32
    return %c0_i32, %c0_i32_0 : i32, i32
  }
  func.func @transform_2(%arg0: i32) -> (i32, i32) {
    %c0_i32 = arith.constant 0 : i32
    %c0_i32_0 = arith.constant 0 : i32
    %c0_i32_1 = arith.constant 0 : i32
    return %c0_i32, %c0_i32_0 : i32, i32
  }
  func.func @transform_3(%arg0: i32) -> (i32, i32) {
    %c0_i32 = arith.constant 0 : i32
    %c0_i32_0 = arith.constant 0 : i32
    %c0_i32_1 = arith.constant 0 : i32
    return %c0_i32, %c0_i32_0 : i32, i32
  }
  func.func @transform_4(%arg0: i32) -> (i32, i32) {
    %c0_i32 = arith.constant 0 : i32
    %c0_i32_0 = arith.constant 0 : i32
    %c0_i32_1 = arith.constant 0 : i32
    return %c0_i32, %c0_i32_0 : i32, i32
  }
  func.func @transform_5(%arg0: i32) -> (i32, i32) {
    %c0_i32 = arith.constant 0 : i32
    %c0_i32_0 = arith.constant 0 : i32
    %c0_i32_1 = arith.constant 0 : i32
    return %c0_i32, %c0_i32_0 : i32, i32
  }
  func.func @transform_6(%arg0: i32) -> (i32, i32) {
    %c0_i32 = arith.constant 0 : i32
    %c0_i32_0 = arith.constant 0 : i32
    %c0_i32_1 = arith.constant 0 : i32
    return %c0_i32, %c0_i32_0 : i32, i32
  }
  func.func @transform_7(%arg0: i32) -> (i32, i32) {
    %c0_i32 = arith.constant 0 : i32
    %c0_i32_0 = arith.constant 0 : i32
    return %c0_i32, %arg0 : i32, i32
  }
}

</mosaic_0001>

<llo_original>
// kernel: tpu_custom_call.1
$region0: #{tpu_custom_call.1}
  #allocation0 [shape = 'u32[]', space=smem, size = 0x4, offset = 0x4, fixed_abs, tag = 'smem constant byte address 0x4 - core index']
  #allocation1 [shape = 'u32[144,128]{1,0:T(1,128)}', space=vmem, size = 0x12000, scoped, tag = 'internal scratch']
  %s0 = inlined_call_operand.vmem [shape: f32[14,8], index: 0, kind: input, shape index: {}]
  %s1 = inlined_call_operand.vmem [shape: f32[32,14], index: 1, kind: input, shape index: {}]
  %s2 = inlined_call_operand.vmem [shape: f32[32,1], index: 2, kind: input, shape index: {}]
  %s3 = inlined_call_operand.vmem [shape: f32[32,32], index: 3, kind: input, shape index: {}]
  %s4 = inlined_call_operand.vmem [shape: f32[32,1], index: 4, kind: input, shape index: {}]
  %s5 = inlined_call_operand.vmem [shape: f32[10,32], index: 5, kind: input, shape index: {}]
  %s6 = inlined_call_operand.vmem [shape: f32[10,1], index: 6, kind: input, shape index: {}]
  %s7 = inlined_call_operand.vmem [shape: f32[10,8], index: 7, kind: output, shape index: {}]
  %s8 = sld [smem:[#allocation0]]
  $region38: #{tpu_custom_call.1} parent=0
    _
  %s10 = ssub.s32 1, %s8
  %s11 = scalar_select 0, %s10, %s8
  // Predicated region
  $region2: #{tpu_custom_call.1} parent=0 // pred_check
    _
  $region3: #{tpu_custom_call.1} parent=0 // pred_check_branch
    %13 = sbr.rel (0) target = $region5
  $region4: #{tpu_custom_call.1} parent=0 // pred_region
    _
  $region5: #{tpu_custom_call.1} parent=0 // pred_fallthru
    _
  // Predicated region
  $region6: #{tpu_custom_call.1} parent=0 // pred_check
    _
  $region7: #{tpu_custom_call.1} parent=0 // pred_check_branch
    %15 = sbr.rel (0) target = $region9
  $region8: #{tpu_custom_call.1} parent=0 // pred_region
    _
  $region9: #{tpu_custom_call.1} parent=0 // pred_fallthru
    _
  // Predicated region
  $region10: #{tpu_custom_call.1} parent=0 // pred_check
    _
  $region11: #{tpu_custom_call.1} parent=0 // pred_check_branch
    %17 = sbr.rel (0) target = $region13
  $region12: #{tpu_custom_call.1} parent=0 // pred_region
    _
  $region13: #{tpu_custom_call.1} parent=0 // pred_fallthru
    _
  // Predicated region
  $region14: #{tpu_custom_call.1} parent=0 // pred_check
    _
  $region15: #{tpu_custom_call.1} parent=0 // pred_check_branch
    %19 = sbr.rel (0) target = $region17
  $region16: #{tpu_custom_call.1} parent=0 // pred_region
    _
  $region17: #{tpu_custom_call.1} parent=0 // pred_fallthru
    _
  // Predicated region
  $region18: #{tpu_custom_call.1} parent=0 // pred_check
    _
  $region19: #{tpu_custom_call.1} parent=0 // pred_check_branch
    %21 = sbr.rel (0) target = $region21
  $region20: #{tpu_custom_call.1} parent=0 // pred_region
    _
  $region21: #{tpu_custom_call.1} parent=0 // pred_fallthru
    _
  // Predicated region
  $region22: #{tpu_custom_call.1} parent=0 // pred_check
    _
  $region23: #{tpu_custom_call.1} parent=0 // pred_check_branch
    %23 = sbr.rel (0) target = $region25
  $region24: #{tpu_custom_call.1} parent=0 // pred_region
    _
  $region25: #{tpu_custom_call.1} parent=0 // pred_fallthru
    _
  // Predicated region
  $region26: #{tpu_custom_call.1} parent=0 // pred_check
    _
  $region27: #{tpu_custom_call.1} parent=0 // pred_check_branch
    %25 = sbr.rel (0) target = $region29
  $region28: #{tpu_custom_call.1} parent=0 // pred_region
    _
  $region29: #{tpu_custom_call.1} parent=0 // pred_fallthru
    _
  %v26 = vld [vmem:[%s1] sm:$0xff]
  %v27 = vld [vmem:[%s1 + $0x8] sm:$0xff]
  %v28 = vld [vmem:[%s1 + $0x10] sm:$0xff]
  %v29 = vld [vmem:[%s1 + $0x18] sm:$0xff]
  %v30 = vld [vmem:[%s0] sm:$0xff]
  %v31 = vld [vmem:[%s0 + $0x8] sm:$0x3f]
  %v32 = vld [vmem:[%s2] sm:$0xff]
  %v33 = vld [vmem:[%s2 + $0x8] sm:$0xff]
  %v34 = vld [vmem:[%s2 + $0x10] sm:$0xff]
  %v35 = vld [vmem:[%s2 + $0x18] sm:$0xff]
  %37 = vset.pattern.permute.xlu0 0
  %38 = vperm.xlu0 %37, %v32
  %v39 = vpop.permute.xlu0 %38
  %42 = vset.pattern.permute.xlu0 0
  %43 = vperm.xlu0 %42, %v33
  %v44 = vpop.permute.xlu0 %43
  %47 = vset.pattern.permute.xlu0 0
  %48 = vperm.xlu0 %47, %v34
  %v49 = vpop.permute.xlu0 %48
  %52 = vset.pattern.permute.xlu0 0
  %53 = vperm.xlu0 %52, %v35
  %v54 = vpop.permute.xlu0 %53
  %vm56 = vcmask 113664
  %v58 = vsel %vm56, %v26, 0
  %v61 = vsel %vm56, %v27, 0
  %v64 = vsel %vm56, %v28, 0
  %v67 = vsel %vm56, %v29, 0
  %vm69 = vcmask 1045504
  %v71 = vsel %vm69, %v31, 0
  %73 = vmatprep.subr.mxu0 0.0
  %74 = vmatpush1.msra.mxu0 0.0
  %75 = vmatprep.subr.mxu0 0.0
  %76 = vmatpush1.msra.mxu0 0.0
  %77 = vmatprep.subr.mxu0 0.0
  %78 = vmatpush1.msra.mxu0 0.0
  %79 = vmatprep.subr.mxu0 0.0
  %80 = vmatpush1.msra.mxu0 0.0
  %81 = vmatprep.subr.mxu0 0.0
  %82 = vmatpush1.msra.mxu0 0.0
  %83 = vmatprep.subr.mxu0 0.0
  %84 = vmatpush1.msra.mxu0 0.0
  %85 = vmatprep.subr.mxu0 0.0
  %86 = vmatpush1.msra.mxu0 0.0
  %87 = vmatprep.subr.mxu0 0.0
  %88 = vmatpush1.msra.mxu0 0.0
  %89 = vmatprep.subr.mxu0 0.0
  %90 = vmatpush1.msra.mxu0 0.0
  %91 = vmatprep.subr.mxu0 0.0
  %92 = vmatpush1.msra.mxu0 0.0
  %93 = vmatprep.subr.mxu0 0.0
  %94 = vmatpush1.msra.mxu0 0.0
  %95 = vmatprep.subr.mxu0 0.0
  %96 = vmatpush1.msra.mxu0 0.0
  %97 = vmatprep.subr.mxu0 0.0
  %98 = vmatpush1.msra.mxu0 0.0
  %99 = vmatprep.subr.mxu0 0.0
  %100 = vmatpush1.msra.mxu0 0.0
  %101 = vmatprep.subr.mxu0 0.0
  %102 = vmatpush1.msra.mxu0 %v71
  %103 = vmatprep.subr.mxu0 0.0
  %104 = vmatpush1.msra.mxu0 %v30
  %105 = vmatprep.subr.mxu0 0.0
  %106 = vmatpush2.msra.mxu0 0.0
  %107 = vmatprep.subr.mxu0 0.0
  %108 = vmatpush2.msra.mxu0 0.0
  %109 = vmatprep.subr.mxu0 0.0
  %110 = vmatpush2.msra.mxu0 0.0
  %111 = vmatprep.subr.mxu0 0.0
  %112 = vmatpush2.msra.mxu0 0.0
  %113 = vmatprep.subr.mxu0 0.0
  %114 = vmatpush2.msra.mxu0 0.0
  %115 = vmatprep.subr.mxu0 0.0
  %116 = vmatpush2.msra.mxu0 0.0
  %117 = vmatprep.subr.mxu0 0.0
  %118 = vmatpush2.msra.mxu0 0.0
  %119 = vmatprep.subr.mxu0 0.0
  %120 = vmatpush2.msra.mxu0 0.0
  %121 = vmatprep.subr.mxu0 0.0
  %122 = vmatpush2.msra.mxu0 0.0
  %123 = vmatprep.subr.mxu0 0.0
  %124 = vmatpush2.msra.mxu0 0.0
  %125 = vmatprep.subr.mxu0 0.0
  %126 = vmatpush2.msra.mxu0 0.0
  %127 = vmatprep.subr.mxu0 0.0
  %128 = vmatpush2.msra.mxu0 0.0
  %129 = vmatprep.subr.mxu0 0.0
  %130 = vmatpush2.msra.mxu0 0.0
  %131 = vmatprep.subr.mxu0 0.0
  %132 = vmatpush2.msra.mxu0 0.0
  %133 = vmatprep.subr.mxu0 0.0
  %134 = vmatpush2.msra.mxu0 0.0
  %135 = vmatprep.subr.mxu0 0.0
  %136 = vmatpush2.msra.mxu0 0.0
  %137 = vmatprep.mubr.f32.mxu0 0.0
  %138 = vmatmul.mubr.f32.gmra.mxu0 %v58
  %v139 = vpop.f32.mrf.mxu0
  %v140 = vadd.f32 %v39, %v139
  %v141 = vpop.f32.mrf.mxu0
  %142 = vmatprep.mubr.f32.mxu0 0.0
  %143 = vmatmul.mubr.f32.gmra.mxu0 %v61
  %v144 = vpop.f32.mrf.mxu0
  %v145 = vadd.f32 %v44, %v144
  %v146 = vpop.f32.mrf.mxu0
  %147 = vmatprep.mubr.f32.mxu0 0.0
  %148 = vmatmul.mubr.f32.gmra.mxu0 %v64
  %v149 = vpop.f32.mrf.mxu0
  %v150 = vadd.f32 %v49, %v149
  %v151 = vpop.f32.mrf.mxu0
  %152 = vmatprep.mubr.f32.mxu0 0.0
  %153 = vmatmul.mubr.f32.gmra.mxu0 %v67
  %v154 = vpop.f32.mrf.mxu0
  %v155 = vadd.f32 %v54, %v154
  %v156 = vpop.f32.mrf.mxu0
  %157 = vdwg.mxu0
  %v158 = vmax.f32 %v140, 0.0
  %v159 = vmax.f32 %v145, 0.0
  %v160 = vmax.f32 %v150, 0.0
  %v161 = vmax.f32 %v155, 0.0
  %v162 = vld [vmem:[%s3] sm:$0xff]
  %v163 = vld [vmem:[%s3 + $0x8] sm:$0xff]
  %v164 = vld [vmem:[%s3 + $0x10] sm:$0xff]
  %v165 = vld [vmem:[%s3 + $0x18] sm:$0xff]
  %v166 = vld [vmem:[%s4] sm:$0xff]
  %v167 = vld [vmem:[%s4 + $0x8] sm:$0xff]
  %v168 = vld [vmem:[%s4 + $0x10] sm:$0xff]
  %v169 = vld [vmem:[%s4 + $0x18] sm:$0xff]
  %171 = vset.pattern.permute.xlu0 0
  %172 = vperm.xlu0 %171, %v166
  %v173 = vpop.permute.xlu0 %172
  %176 = vset.pattern.permute.xlu0 0
  %177 = vperm.xlu0 %176, %v167
  %v178 = vpop.permute.xlu0 %177
  %181 = vset.pattern.permute.xlu0 0
  %182 = vperm.xlu0 %181, %v168
  %v183 = vpop.permute.xlu0 %182
  %186 = vset.pattern.permute.xlu0 0
  %187 = vperm.xlu0 %186, %v169
  %v188 = vpop.permute.xlu0 %187
  %vm190 = vcmask 261120
  %v192 = vsel %vm190, %v162, 0
  %v195 = vsel %vm190, %v163, 0
  %v198 = vsel %vm190, %v164, 0
  %v201 = vsel %vm190, %v165, 0
  %203 = vmatprep.subr.mxu0 0.0
  %204 = vmatpush1.msra.mxu0 0.0
  %205 = vmatprep.subr.mxu0 0.0
  %206 = vmatpush1.msra.mxu0 0.0
  %207 = vmatprep.subr.mxu0 0.0
  %208 = vmatpush1.msra.mxu0 0.0
  %209 = vmatprep.subr.mxu0 0.0
  %210 = vmatpush1.msra.mxu0 0.0
  %211 = vmatprep.subr.mxu0 0.0
  %212 = vmatpush1.msra.mxu0 0.0
  %213 = vmatprep.subr.mxu0 0.0
  %214 = vmatpush1.msra.mxu0 0.0
  %215 = vmatprep.subr.mxu0 0.0
  %216 = vmatpush1.msra.mxu0 0.0
  %217 = vmatprep.subr.mxu0 0.0
  %218 = vmatpush1.msra.mxu0 0.0
  %219 = vmatprep.subr.mxu0 0.0
  %220 = vmatpush1.msra.mxu0 0.0
  %221 = vmatprep.subr.mxu0 0.0
  %222 = vmatpush1.msra.mxu0 0.0
  %223 = vmatprep.subr.mxu0 0.0
  %224 = vmatpush1.msra.mxu0 0.0
  %225 = vmatprep.subr.mxu0 0.0
  %226 = vmatpush1.msra.mxu0 0.0
  %227 = vmatprep.subr.mxu0 0.0
  %228 = vmatpush1.msra.mxu0 %v161
  %229 = vmatprep.subr.mxu0 0.0
  %230 = vmatpush1.msra.mxu0 %v160
  %231 = vmatprep.subr.mxu0 0.0
  %232 = vmatpush1.msra.mxu0 %v159
  %233 = vmatprep.subr.mxu0 0.0
  %234 = vmatpush1.msra.mxu0 %v158
  %235 = vmatprep.subr.mxu0 0.0
  %236 = vmatpush2.msra.mxu0 0.0
  %237 = vmatprep.subr.mxu0 0.0
  %238 = vmatpush2.msra.mxu0 0.0
  %239 = vmatprep.subr.mxu0 0.0
  %240 = vmatpush2.msra.mxu0 0.0
  %241 = vmatprep.subr.mxu0 0.0
  %242 = vmatpush2.msra.mxu0 0.0
  %243 = vmatprep.subr.mxu0 0.0
  %244 = vmatpush2.msra.mxu0 0.0
  %245 = vmatprep.subr.mxu0 0.0
  %246 = vmatpush2.msra.mxu0 0.0
  %247 = vmatprep.subr.mxu0 0.0
  %248 = vmatpush2.msra.mxu0 0.0
  %249 = vmatprep.subr.mxu0 0.0
  %250 = vmatpush2.msra.mxu0 0.0
  %251 = vmatprep.subr.mxu0 0.0
  %252 = vmatpush2.msra.mxu0 0.0
  %253 = vmatprep.subr.mxu0 0.0
  %254 = vmatpush2.msra.mxu0 0.0
  %255 = vmatprep.subr.mxu0 0.0
  %256 = vmatpush2.msra.mxu0 0.0
  %257 = vmatprep.subr.mxu0 0.0
  %258 = vmatpush2.msra.mxu0 0.0
  %259 = vmatprep.subr.mxu0 0.0
  %260 = vmatpush2.msra.mxu0 0.0
  %261 = vmatprep.subr.mxu0 0.0
  %262 = vmatpush2.msra.mxu0 0.0
  %263 = vmatprep.subr.mxu0 0.0
  %264 = vmatpush2.msra.mxu0 0.0
  %265 = vmatprep.subr.mxu0 0.0
  %266 = vmatpush2.msra.mxu0 0.0
  %267 = vmatprep.mubr.f32.mxu0 0.0
  %268 = vmatmul.mubr.f32.gmra.mxu0 %v192
  %v269 = vpop.f32.mrf.mxu0
  %v270 = vadd.f32 %v173, %v269
  %v271 = vpop.f32.mrf.mxu0
  %272 = vmatprep.mubr.f32.mxu0 0.0
  %273 = vmatmul.mubr.f32.gmra.mxu0 %v195
  %v274 = vpop.f32.mrf.mxu0
  %v275 = vadd.f32 %v178, %v274
  %v276 = vpop.f32.mrf.mxu0
  %277 = vmatprep.mubr.f32.mxu0 0.0
  %278 = vmatmul.mubr.f32.gmra.mxu0 %v198
  %v279 = vpop.f32.mrf.mxu0
  %v280 = vadd.f32 %v183, %v279
  %v281 = vpop.f32.mrf.mxu0
  %282 = vmatprep.mubr.f32.mxu0 0.0
  %283 = vmatmul.mubr.f32.gmra.mxu0 %v201
  %v284 = vpop.f32.mrf.mxu0
  %v285 = vadd.f32 %v188, %v284
  %v286 = vpop.f32.mrf.mxu0
  %287 = vdwg.mxu0
  %v288 = vmax.f32 %v270, 0.0
  %v289 = vmax.f32 %v275, 0.0
  %v290 = vmax.f32 %v280, 0.0
  %v291 = vmax.f32 %v285, 0.0
  %v292 = vld [vmem:[%s5] sm:$0xff]
  %v293 = vld [vmem:[%s5 + $0x8] sm:$0x3]
  %v294 = vld [vmem:[%s6] sm:$0xff]
  %v295 = vld [vmem:[%s6 + $0x8] sm:$0x3]
  %297 = vset.pattern.permute.xlu0 0
  %298 = vperm.xlu0 %297, %v294
  %v299 = vpop.permute.xlu0 %298
  %302 = vset.pattern.permute.xlu0 0
  %303 = vperm.xlu0 %302, %v295
  %v304 = vpop.permute.xlu0 %303
  %v307 = vsel %vm190, %v292, 0
  %v310 = vsel %vm190, %v293, 0
  %312 = vmatprep.subr.mxu0 0.0
  %313 = vmatpush1.msra.mxu0 0.0
  %314 = vmatprep.subr.mxu0 0.0
  %315 = vmatpush1.msra.mxu0 0.0
  %316 = vmatprep.subr.mxu0 0.0
  %317 = vmatpush1.msra.mxu0 0.0
  %318 = vmatprep.subr.mxu0 0.0
  %319 = vmatpush1.msra.mxu0 0.0
  %320 = vmatprep.subr.mxu0 0.0
  %321 = vmatpush1.msra.mxu0 0.0
  %322 = vmatprep.subr.mxu0 0.0
  %323 = vmatpush1.msra.mxu0 0.0
  %324 = vmatprep.subr.mxu0 0.0
  %325 = vmatpush1.msra.mxu0 0.0
  %326 = vmatprep.subr.mxu0 0.0
  %327 = vmatpush1.msra.mxu0 0.0
  %328 = vmatprep.subr.mxu0 0.0
  %329 = vmatpush1.msra.mxu0 0.0
  %330 = vmatprep.subr.mxu0 0.0
  %331 = vmatpush1.msra.mxu0 0.0
  %332 = vmatprep.subr.mxu0 0.0
  %333 = vmatpush1.msra.mxu0 0.0
  %334 = vmatprep.subr.mxu0 0.0
  %335 = vmatpush1.msra.mxu0 0.0
  %336 = vmatprep.subr.mxu0 0.0
  %337 = vmatpush1.msra.mxu0 %v291
  %338 = vmatprep.subr.mxu0 0.0
  %339 = vmatpush1.msra.mxu0 %v290
  %340 = vmatprep.subr.mxu0 0.0
  %341 = vmatpush1.msra.mxu0 %v289
  %342 = vmatprep.subr.mxu0 0.0
  %343 = vmatpush1.msra.mxu0 %v288
  %344 = vmatprep.subr.mxu0 0.0
  %345 = vmatpush2.msra.mxu0 0.0
  %346 = vmatprep.subr.mxu0 0.0
  %347 = vmatpush2.msra.mxu0 0.0
  %348 = vmatprep.subr.mxu0 0.0
  %349 = vmatpush2.msra.mxu0 0.0
  %350 = vmatprep.subr.mxu0 0.0
  %351 = vmatpush2.msra.mxu0 0.0
  %352 = vmatprep.subr.mxu0 0.0
  %353 = vmatpush2.msra.mxu0 0.0
  %354 = vmatprep.subr.mxu0 0.0
  %355 = vmatpush2.msra.mxu0 0.0
  %356 = vmatprep.subr.mxu0 0.0
  %357 = vmatpush2.msra.mxu0 0.0
  %358 = vmatprep.subr.mxu0 0.0
  %359 = vmatpush2.msra.mxu0 0.0
  %360 = vmatprep.subr.mxu0 0.0
  %361 = vmatpush2.msra.mxu0 0.0
  %362 = vmatprep.subr.mxu0 0.0
  %363 = vmatpush2.msra.mxu0 0.0
  %364 = vmatprep.subr.mxu0 0.0
  %365 = vmatpush2.msra.mxu0 0.0
  %366 = vmatprep.subr.mxu0 0.0
  %367 = vmatpush2.msra.mxu0 0.0
  %368 = vmatprep.subr.mxu0 0.0
  %369 = vmatpush2.msra.mxu0 0.0
  %370 = vmatprep.subr.mxu0 0.0
  %371 = vmatpush2.msra.mxu0 0.0
  %372 = vmatprep.subr.mxu0 0.0
  %373 = vmatpush2.msra.mxu0 0.0
  %374 = vmatprep.subr.mxu0 0.0
  %375 = vmatpush2.msra.mxu0 0.0
  %376 = vmatprep.mubr.f32.mxu0 0.0
  %377 = vmatmul.mubr.f32.gmra.mxu0 %v307
  %v378 = vpop.f32.mrf.mxu0
  %v379 = vadd.f32 %v299, %v378
  %v380 = vpop.f32.mrf.mxu0
  %381 = vmatprep.mubr.f32.mxu0 0.0
  %382 = vmatmul.mubr.f32.gmra.mxu0 %v310
  %v383 = vpop.f32.mrf.mxu0
  %v384 = vadd.f32 %v304, %v383
  %v385 = vpop.f32.mrf.mxu0
  %386 = vdwg.mxu0
  %vm387 = vcmask 64512
  %388 = vst.msk [vmem:[%s7] sm:$0xff] %vm387, %v379
  %vm389 = vcmask 58368
  %390 = vst.msk [vmem:[%s7 + $0x8] sm:$0x3] %vm389, %v384
  // Predicated region
  $region30: #{tpu_custom_call.1} parent=0 // pred_check
    _
  $region31: #{tpu_custom_call.1} parent=0 // pred_check_branch
    %392 = sbr.rel (0) target = $region33
  $region32: #{tpu_custom_call.1} parent=0 // pred_region
    _
  $region33: #{tpu_custom_call.1} parent=0 // pred_fallthru
    _
  // Predicated region
  $region34: #{tpu_custom_call.1} parent=0 // pred_check
    _
  $region35: #{tpu_custom_call.1} parent=0 // pred_check_branch
    %394 = sbr.rel (0) target = $region37
  $region36: #{tpu_custom_call.1} parent=0 // pred_region
    _
  $region37: #{tpu_custom_call.1} parent=0 // pred_fallthru
    _

</llo_original>
